<compile_context>
chip_gen: v6e
topology: v6e:2x2x1
jax: 0.10.0
libtpu: 0.0.40
codegen_flags: <defaults>
</compile_context>

<pallas_src>
import jax
import jax.numpy as jnp
from jax.experimental import pallas as pl
from jax.experimental.pallas import tpu as pltpu

C_PAD = 128  # lane-dense output slab width: unmasked vst, full-width DMA


def _round_up(x: int, m: int) -> int:
    return (x + m - 1) // m * m


def _pick_batch_tile(b8: int, block_b: int) -> int:
    """Pick a batch tile (multiple of 8) that divides b8 when possible.

    Preference order: (a) no pad copy (tile divides b8), (b) >= 2 grid steps so
    both v7x TensorCores engage, (c) as large as possible (<= block_b) to
    amortize per-grid-step overhead.
    """
    block_b = max(8, block_b - block_b % 8)
    if b8 <= block_b:
        if b8 >= 16 and b8 % 16 == 0:
            return b8 // 2            # two grid steps, still no padding
        return b8                     # single step (tiny batch)
    for t in range(block_b, 7, -8):   # largest multiple-of-8 divisor of b8
        if b8 % t == 0:
            return t
    return block_b                    # no divisor: ragged tail gets padded


def head_kernel(x_ref, w1_ref, b1_ref, w2_ref, b2_ref, out_ref):
    """Fused LayerNorm (affine pre-folded into W1/b1) + Linear + ReLU + Linear.

    x_ref:   [TB, H]    bf16 CLS-token activations (one batch tile)
    w1_ref:  [H, D1]    bf16 gamma-folded first Linear weight (resident)
    b1_ref:  [1, D1]    f32 beta-folded first Linear bias
    w2_ref:  [D1, 128]  bf16 zero-padded (lane-dense) second Linear weight
    b2_ref:  [1, 128]   f32 zero-padded second Linear bias
    out_ref: [TB, 128]  bf16 lane-dense logits slab (real logits in [:, :C])
    """
    x = x_ref[...].astype(jnp.float32)                 # upcast once, f32 VPU math
    inv_h = 1.0 / x.shape[-1]

    # --- LayerNorm statistics (two-pass centered variance, eps matches torch) ---
    mean = jnp.sum(x, axis=-1, keepdims=True) * inv_h
    xc = x - mean
    var = jnp.sum(xc * xc, axis=-1, keepdims=True) * inv_h
    xn = xc * jax.lax.rsqrt(var + 1e-5)

    # Dropout(p=0.2): identity in eval mode (deterministic inference path).

    # --- Dense head (LN affine folded into W1/b1): Linear -> ReLU -> Linear ---
    h = jnp.dot(xn.astype(jnp.bfloat16), w1_ref[...],
                preferred_element_type=jnp.float32)
    h = jnp.maximum(h + b1_ref[...], 0.0)              # [TB, D1] f32

    logits = jnp.dot(h.astype(jnp.bfloat16), w2_ref[...],
                     preferred_element_type=jnp.float32)
    out_ref[...] = (logits + b2_ref[...]).astype(out_ref.dtype)


def prepare_head_params(gamma, beta, w1, b1, w2, b2):
    """One-time (model-load-time) parameter preparation — NOT in the hot path.

    Folds the LayerNorm affine into the first Linear (valid for the eval-mode
    path where dropout is identity):
        (xn*gamma + beta) @ W1 + b1 == xn @ (gamma[:,None]*W1) + (beta@W1 + b1)
    and zero-pads the classifier to a lane-dense 128-wide slab. Heavy matmul
    operands are cast to bf16 (MXU-native on v5e/v6e/v7x, halves HBM traffic).
    """
    H, D1 = w1.shape
    C = w2.shape[-1]
    f32 = jnp.float32

    g = jnp.reshape(gamma.astype(f32), (H, 1))
    bt = jnp.reshape(beta.astype(f32), (1, H))
    w1f = (g * w1.astype(f32)).astype(jnp.bfloat16)                       # [H, D1]
    b1f = (bt @ w1.astype(f32) + jnp.reshape(b1.astype(f32), (1, D1)))    # [1, D1] f32

    w2p = jnp.zeros((D1, C_PAD), jnp.bfloat16).at[:, :C].set(
        w2.astype(jnp.bfloat16))
    b2p = jnp.zeros((1, C_PAD), f32).at[:, :C].set(
        jnp.reshape(b2.astype(f32), (1, C)))

    return {"w1": w1f, "b1": b1f, "w2": w2p, "b2": b2p, "num_classes": int(C)}


def depression_head(cls_token, head, *, block_b=512, x_buffers=2):
    """cls_token: [B, H] -> logits [B, C] (f32)."""
    B, H = cls_token.shape
    D1 = head["w1"].shape[1]
    C = head["num_classes"]

    b8 = _round_up(max(B, 1), 8)
    tb = _pick_batch_tile(b8, block_b)
    b_pad = _round_up(b8, tb)            # == b8 whenever tb divides b8

    x = cls_token.astype(jnp.bfloat16)   # bf16 DMA halves activation traffic
    if b_pad != B:
        # Only taken when B isn't a multiple of 8 or no divisor tile exists;
        # the common large-B fast path (B % 8 == 0, divisor tile) copies nothing.
        x = jnp.zeros((b_pad, H), jnp.bfloat16).at[:B].set(x)

    x_spec_kwargs = {}
    if x_buffers > 2:
        # Deepen the activation pipeline only if profiling shows exposed x DMA.
        x_spec_kwargs["pipeline_mode"] = pl.Buffered(x_buffers)

    bytes_accessed = (b_pad * H * 2          # x (bf16)
                      + H * D1 * 2           # W1 (bf16, resident: fetched once)
                      + D1 * C_PAD * 2       # W2 (bf16)
                      + (D1 + C_PAD) * 4     # biases (f32)
                      + b_pad * C_PAD * 2)   # logits slab (bf16)
    flops = 2 * b_pad * H * D1 + 2 * b_pad * D1 * C_PAD

    out = pl.pallas_call(
        head_kernel,
        out_shape=jax.ShapeDtypeStruct((b_pad, C_PAD), jnp.bfloat16),
        grid=(b_pad // tb,),
        in_specs=[
            pl.BlockSpec((tb, H), lambda i: (i, 0), **x_spec_kwargs),  # activations
            pl.BlockSpec((H, D1), lambda i: (0, 0)),     # weights stay resident
            pl.BlockSpec((1, D1), lambda i: (0, 0)),
            pl.BlockSpec((D1, C_PAD), lambda i: (0, 0)),
            pl.BlockSpec((1, C_PAD), lambda i: (0, 0)),
        ],
        out_specs=pl.BlockSpec((tb, C_PAD), lambda i: (i, 0)),
        compiler_params=pltpu.CompilerParams(
            dimension_semantics=("parallel",),
            vmem_limit_bytes=32 << 20,
        ),
        cost_estimate=pl.CostEstimate(
            flops=flops, transcendentals=b_pad, bytes_accessed=bytes_accessed),
    )(x, head["w1"], head["b1"], head["w2"], head["b2"])

    return out[:B, :C].astype(jnp.float32)


def depression_model_forward(input_ids, token_type_ids, attention_mask,
                             embed, head_params):
    """Full forward. Backbone is a deterministic synthetic stand-in."""
    # TODO(synk): the pretrained Longformer backbone has no in-script Pallas
    # equivalent; replaced by a deterministic embedding lookup. Only the CLS
    # row is consumed, so gather just input_ids[:, 0] instead of materializing
    # the full [B, S, H] last_hidden_state. The attention mask gates attention
    # inside the (omitted) backbone and does not scale hidden states; the
    # Longformer ignores token_type_ids.
    del token_type_ids, attention_mask
    cls_token = embed[input_ids[:, 0]]                   # [B, H]
    return depression_head(cls_token, head_params)


if __name__ == "__main__":
    # Small shapes consistent with the module: batch=2, seq=8, hidden=32,
    # dense intermediate=256 (as in the module), num_classes=3, vocab=64.
    B, S, H, D1, C, V = 2, 8, 32, 256, 3, 64

    key = jax.random.PRNGKey(0)
    k_emb, k_g, k_b, k_w1, k_b1, k_w2, k_b2, k_ids = jax.random.split(key, 8)

    embed = jax.random.normal(k_emb, (V, H), jnp.float32) * 0.02
    gamma = jnp.ones((H,), jnp.float32) \
        + 0.01 * jax.random.normal(k_g, (H,), jnp.float32)
    beta = 0.01 * jax.random.normal(k_b, (H,), jnp.float32)
    w1 = jax.random.normal(k_w1, (H, D1), jnp.float32) * (1.0 / H ** 0.5)
    b1 = 0.01 * jax.random.normal(k_b1, (D1,), jnp.float32)
    w2 = jax.random.normal(k_w2, (D1, C), jnp.float32) * (1.0 / D1 ** 0.5)
    b2 = 0.01 * jax.random.normal(k_b2, (C,), jnp.float32)

    # Load-time preparation (weight fold / pad / bf16 cast) — executed ONCE,
    # not on every forward call.
    head_params = prepare_head_params(gamma, beta, w1, b1, w2, b2)
    head_params = jax.tree_util.tree_map(
        lambda a: jax.block_until_ready(a) if isinstance(a, jax.Array) else a,
        head_params)

    input_ids = jax.random.randint(k_ids, (B, S), 0, V, jnp.int32)
    token_type_ids = jnp.zeros((B, S), jnp.int32)
    attention_mask = jnp.ones((B, S), jnp.int32)

    logits = depression_model_forward(input_ids, token_type_ids,
                                      attention_mask, embed, head_params)
    jax.block_until_ready(logits)
    assert logits.shape == (B, C) and logits.dtype == jnp.float32
    print("KERNEL_OK")
</pallas_src>

<mosaic_0001>
module attributes {stable_mosaic.version = 11 : i64} {
  func.func @head_kernel(%arg0: i32, %arg1: memref<8x32xbf16, #tpu.memory_space<vmem>>, %arg2: memref<32x256xbf16, #tpu.memory_space<vmem>>, %arg3: memref<1x256xf32, #tpu.memory_space<vmem>>, %arg4: memref<256x128xbf16, #tpu.memory_space<vmem>>, %arg5: memref<1x128xf32, #tpu.memory_space<vmem>>, %arg6: memref<8x128xbf16, #tpu.memory_space<vmem>>) attributes {dimension_semantics = [#tpu.dimension_semantics<parallel>], iteration_bounds = array<i64: 1>, scalar_prefetch = 0 : i64, scratch_operands = 0 : i64, tpu.core_type = #tpu.core_type<tc>, window_params = [{transform_indices = @transform_0, window_bounds = array<i64: 8, 32>}, {pipeline_mode = #tpu.pipeline_mode<synchronous>, transform_indices = @transform_1, window_bounds = array<i64: 32, 256>}, {pipeline_mode = #tpu.pipeline_mode<synchronous>, transform_indices = @transform_2, window_bounds = array<i64: 1, 256>}, {pipeline_mode = #tpu.pipeline_mode<synchronous>, transform_indices = @transform_3, window_bounds = array<i64: 256, 128>}, {pipeline_mode = #tpu.pipeline_mode<synchronous>, transform_indices = @transform_4, window_bounds = array<i64: 1, 128>}, {transform_indices = @transform_5, window_bounds = array<i64: 8, 128>}]} {
    %c0 = arith.constant 0 : index
    %c0_0 = arith.constant 0 : index
    %0 = vector.load %arg1[%c0, %c0_0] : memref<8x32xbf16, #tpu.memory_space<vmem>>, vector<8x32xbf16>
    %1 = arith.extf %0 : vector<8x32xbf16> to vector<8x32xf32>
    %cst = arith.constant dense<0.000000e+00> : vector<8xf32>
    %2 = vector.multi_reduction <add>, %1, %cst [1] : vector<8x32xf32> to vector<8xf32>
    %3 = vector.shape_cast %2 : vector<8xf32> to vector<8x1xf32>
    %cst_1 = arith.constant 3.125000e-02 : f32
    %4 = vector.broadcast %cst_1 : f32 to vector<8x1xf32>
    %5 = arith.mulf %3, %4 : vector<8x1xf32>
    %6 = vector.broadcast %5 : vector<8x1xf32> to vector<8x32xf32>
    %7 = arith.subf %1, %6 : vector<8x32xf32>
    %8 = arith.mulf %7, %7 : vector<8x32xf32>
    %cst_2 = arith.constant dense<0.000000e+00> : vector<8xf32>
    %9 = vector.multi_reduction <add>, %8, %cst_2 [1] : vector<8x32xf32> to vector<8xf32>
    %10 = vector.shape_cast %9 : vector<8xf32> to vector<8x1xf32>
    %cst_3 = arith.constant 3.125000e-02 : f32
    %11 = vector.broadcast %cst_3 : f32 to vector<8x1xf32>
    %12 = arith.mulf %10, %11 : vector<8x1xf32>
    %cst_4 = arith.constant 9.99999974E-6 : f32
    %13 = vector.broadcast %cst_4 : f32 to vector<8x1xf32>
    %14 = arith.addf %12, %13 : vector<8x1xf32>
    %15 = math.rsqrt %14 : vector<8x1xf32>
    %16 = vector.broadcast %15 : vector<8x1xf32> to vector<8x32xf32>
    %17 = arith.mulf %7, %16 : vector<8x32xf32>
    %18 = arith.truncf %17 : vector<8x32xf32> to vector<8x32xbf16>
    %c0_5 = arith.constant 0 : index
    %c0_6 = arith.constant 0 : index
    %19 = vector.load %arg2[%c0_5, %c0_6] : memref<32x256xbf16, #tpu.memory_space<vmem>>, vector<32x256xbf16>
    %cst_7 = arith.constant dense<0.000000e+00> : vector<8x256xf32>
    %20 = tpu.matmul %18, %19, %cst_7 {dimension_numbers = #tpu.dot_dimension_numbers<[1], [0], [0], [1], [0, 0, 1, 1], [], []>} : vector<8x32xbf16>, vector<32x256xbf16>, vector<8x256xf32> -> vector<8x256xf32>
    %c0_8 = arith.constant 0 : index
    %c0_9 = arith.constant 0 : index
    %21 = vector.load %arg3[%c0_8, %c0_9] : memref<1x256xf32, #tpu.memory_space<vmem>>, vector<1x256xf32>
    %22 = vector.broadcast %21 : vector<1x256xf32> to vector<8x256xf32>
    %23 = arith.addf %20, %22 : vector<8x256xf32>
    %cst_10 = arith.constant 0.000000e+00 : f32
    %24 = vector.broadcast %cst_10 : f32 to vector<8x256xf32>
    %25 = arith.maximumf %23, %24 : vector<8x256xf32>
    %26 = arith.truncf %25 : vector<8x256xf32> to vector<8x256xbf16>
    %c0_11 = arith.constant 0 : index
    %c0_12 = arith.constant 0 : index
    %27 = vector.load %arg4[%c0_11, %c0_12] : memref<256x128xbf16, #tpu.memory_space<vmem>>, vector<256x128xbf16>
    %cst_13 = arith.constant dense<0.000000e+00> : vector<8x128xf32>
    %28 = tpu.matmul %26, %27, %cst_13 {dimension_numbers = #tpu.dot_dimension_numbers<[1], [0], [0], [1], [0, 0, 1, 1], [], []>} : vector<8x256xbf16>, vector<256x128xbf16>, vector<8x128xf32> -> vector<8x128xf32>
    %c0_14 = arith.constant 0 : index
    %c0_15 = arith.constant 0 : index
    %29 = vector.load %arg5[%c0_14, %c0_15] : memref<1x128xf32, #tpu.memory_space<vmem>>, vector<1x128xf32>
    %30 = vector.broadcast %29 : vector<1x128xf32> to vector<8x128xf32>
    %31 = arith.addf %28, %30 : vector<8x128xf32>
    %32 = arith.truncf %31 : vector<8x128xf32> to vector<8x128xbf16>
    %c0_16 = arith.constant 0 : index
    %c0_17 = arith.constant 0 : index
    %33 = vector.load %arg6[%c0_16, %c0_17] : memref<8x128xbf16, #tpu.memory_space<vmem>>, vector<8x128xbf16>
    tpu.vector_store %arg6[%c0_16, %c0_17], %32 {strides = array<i32>} : memref<8x128xbf16, #tpu.memory_space<vmem>>, vector<8x128xbf16>,
    return
  }
  func.func @transform_0(%arg0: i32) -> (i32, i32) {
    %c0_i32 = arith.constant 0 : i32
    %c0_i32_0 = arith.constant 0 : i32
    return %arg0, %c0_i32 : i32, i32
  }
  func.func @transform_1(%arg0: i32) -> (i32, i32) {
    %c0_i32 = arith.constant 0 : i32
    %c0_i32_0 = arith.constant 0 : i32
    %c0_i32_1 = arith.constant 0 : i32
    return %c0_i32, %c0_i32_0 : i32, i32
  }
  func.func @transform_2(%arg0: i32) -> (i32, i32) {
    %c0_i32 = arith.constant 0 : i32
    %c0_i32_0 = arith.constant 0 : i32
    %c0_i32_1 = arith.constant 0 : i32
    return %c0_i32, %c0_i32_0 : i32, i32
  }
  func.func @transform_3(%arg0: i32) -> (i32, i32) {
    %c0_i32 = arith.constant 0 : i32
    %c0_i32_0 = arith.constant 0 : i32
    %c0_i32_1 = arith.constant 0 : i32
    return %c0_i32, %c0_i32_0 : i32, i32
  }
  func.func @transform_4(%arg0: i32) -> (i32, i32) {
    %c0_i32 = arith.constant 0 : i32
    %c0_i32_0 = arith.constant 0 : i32
    %c0_i32_1 = arith.constant 0 : i32
    return %c0_i32, %c0_i32_0 : i32, i32
  }
  func.func @transform_5(%arg0: i32) -> (i32, i32) {
    %c0_i32 = arith.constant 0 : i32
    %c0_i32_0 = arith.constant 0 : i32
    return %arg0, %c0_i32 : i32, i32
  }
}

</mosaic_0001>

<llo_original>
// kernel: tpu_custom_call.1
$region0: #{tpu_custom_call.1}
  #allocation0 [shape = 'u32[]', space=smem, size = 0x4, offset = 0x4, fixed_abs, tag = 'smem constant byte address 0x4 - core index']
  #allocation1 [shape = 'u32[144,128]{1,0:T(1,128)}', space=vmem, size = 0x12000, scoped, tag = 'internal scratch']
  %s0 = inlined_call_operand.hbm [shape: bf16[8,32], index: 0, kind: input, shape index: {}]
  %s1 = inlined_call_operand.hbm [shape: bf16[32,256], index: 1, kind: input, shape index: {}]
  %s2 = inlined_call_operand.vmem [shape: f32[1,256], index: 2, kind: input, shape index: {}]
  %s3 = inlined_call_operand.hbm [shape: bf16[256,128], index: 3, kind: input, shape index: {}]
  %s4 = inlined_call_operand.vmem [shape: f32[1,128], index: 4, kind: input, shape index: {}]
  %s5 = inlined_call_operand.hbm [shape: bf16[8,128], index: 5, kind: output, shape index: {}]
  %s6 = sld [smem:[#allocation0]]
  $region42: #{tpu_custom_call.1} parent=0
    _
  %s8 = ssub.s32 1, %s6
  %s9 = scalar_select 0, %s8, %s6
  $region1: #{tpu_custom_call.1} parent=0
    #allocation2 [shape = 'u8[2048]{0}', space=vmem, size = 0x800, scoped, tag = 'input window, operand 0, single buffered']
    #allocation3 [shape = 's32[1]{0}', space=sflag, size = 0x4, scoped, tag = 'scoped memory for tpu_custom_call.1']
    #allocation4 [shape = 's32[1]{0}', space=sflag, size = 0x4, scoped, tag = 'scoped memory for tpu_custom_call.1']
    #allocation5 [shape = 'u8[16384]{0}', space=vmem, size = 0x4000, scoped, tag = 'input window, operand 1, single buffered']
    #allocation6 [shape = 's32[1]{0}', space=sflag, size = 0x4, scoped, tag = 'scoped memory for tpu_custom_call.1']
    #allocation7 [shape = 'u8[65536]{0}', space=vmem, size = 0x10000, scoped, tag = 'input window, operand 3, single buffered']
    #allocation8 [shape = 'u8[2048]{0}', space=vmem, size = 0x800, scoped, tag = 'output window, operand 0, single buffered']
    %10 = vsyncpa [#allocation3], 0
    %11 = vsyncpa [#allocation6], 0
    %12 = vsyncpa [#allocation4], 0
    // Predicated region
    $region2: #{tpu_custom_call.1} parent=1 // pred_check
      _
    $region3: #{tpu_custom_call.1} parent=1 // pred_check_branch
      %14 = sbr.rel (0) target = $region5
    $region4: #{tpu_custom_call.1} parent=1 // pred_region
      %s16 = ssub.s32 64, 64
      %17 = vsyncadd [#allocation3], %s16
      %s19 = sshll.u32 [#allocation2], 4
      %s20 = int_to_ptr.vmem [resolvable:$true] %s19
      %22 = dma.hbm_to_vmem [thread:$0]  %s0, 64, %s20, [#allocation3]
    $region5: #{tpu_custom_call.1} parent=1 // pred_fallthru
      _
    // Predicated region
    $region6: #{tpu_custom_call.1} parent=1 // pred_check
      _
    $region7: #{tpu_custom_call.1} parent=1 // pred_check_branch
      %24 = sbr.rel (0) target = $region9
    $region8: #{tpu_custom_call.1} parent=1 // pred_region
      %s26 = ssub.s32 512, 512
      %27 = vsyncadd [#allocation6], %s26
      %s28 = sshll.u32 [#allocation5], 4
      %s29 = int_to_ptr.vmem [resolvable:$true] %s28
      %34 = dma.hbm_to_vmem [thread:$0]  %s1, 512, %s29, [#allocation6], 128, 128, 8
    $region9: #{tpu_custom_call.1} parent=1 // pred_fallthru
      _
    // Predicated region
    $region10: #{tpu_custom_call.1} parent=1 // pred_check
      _
    $region11: #{tpu_custom_call.1} parent=1 // pred_check_branch
      %36 = sbr.rel (0) target = $region13
    $region12: #{tpu_custom_call.1} parent=1 // pred_region
      _
    $region13: #{tpu_custom_call.1} parent=1 // pred_fallthru
      _
    // Predicated region
    $region14: #{tpu_custom_call.1} parent=1 // pred_check
      _
    $region15: #{tpu_custom_call.1} parent=1 // pred_check_branch
      %38 = sbr.rel (0) target = $region17
    $region16: #{tpu_custom_call.1} parent=1 // pred_region
      %s40 = ssub.s32 2048, 2048
      %41 = vsyncadd [#allocation6], %s40
      %s42 = sshll.u32 [#allocation7], 4
      %s43 = int_to_ptr.vmem [resolvable:$true] %s42
      %48 = dma.hbm_to_vmem [thread:$0]  %s3, 2048, %s43, [#allocation6], 64, 64, 4
    $region17: #{tpu_custom_call.1} parent=1 // pred_fallthru
      _
    // Predicated region
    $region18: #{tpu_custom_call.1} parent=1 // pred_check
      _
    $region19: #{tpu_custom_call.1} parent=1 // pred_check_branch
      %50 = sbr.rel (0) target = $region21
    $region20: #{tpu_custom_call.1} parent=1 // pred_region
      _
    $region21: #{tpu_custom_call.1} parent=1 // pred_fallthru
      _
    // Predicated region
    $region22: #{tpu_custom_call.1} parent=1 // pred_check
      _
    $region23: #{tpu_custom_call.1} parent=1 // pred_check_branch
      %52 = sbr.rel (0) target = $region25
    $region24: #{tpu_custom_call.1} parent=1 // pred_region
      %53 = dma.done [#allocation3], 64
    $region25: #{tpu_custom_call.1} parent=1 // pred_fallthru
      _
    // Predicated region
    $region26: #{tpu_custom_call.1} parent=1 // pred_check
      _
    $region27: #{tpu_custom_call.1} parent=1 // pred_check_branch
      %55 = sbr.rel (0) target = $region29
    $region28: #{tpu_custom_call.1} parent=1 // pred_region
      %56 = dma.done [#allocation6], 512
    $region29: #{tpu_custom_call.1} parent=1 // pred_fallthru
      _
    // Predicated region
    $region30: #{tpu_custom_call.1} parent=1 // pred_check
      _
    $region31: #{tpu_custom_call.1} parent=1 // pred_check_branch
      %58 = sbr.rel (0) target = $region33
    $region32: #{tpu_custom_call.1} parent=1 // pred_region
      %59 = dma.done [#allocation6], 2048
    $region33: #{tpu_custom_call.1} parent=1 // pred_fallthru
      _
    %v61 = vld [vmem:[#allocation2] sm:$0xf]
    %v62 = vunpack.c.l.bf16 %v61
    %vm63 = vcmask 261120
    %v64 = vsel %vm63, %v62, 0.0
    %65 = vadd.xlane.f32.xlu0 %v64
    %v66 = vpop.xlane.xlu0 %65
    %v67 = vmul.f32 %v66, 0.03125
    %v68 = vsub.f32 %v62, %v67
    %v69 = vmul.f32 %v68, %v68
    %v70 = vsel %vm63, %v69, 0.0
    %71 = vadd.xlane.f32.xlu0 %v70
    %v72 = vpop.xlane.xlu0 %71
    %v73 = vmul.f32 %v72, 0.03125
    %v74 = vadd.f32 %v73, 1e-05
    %v75 = vrsqrt.pop %v74
    %v76 = vmul.f32 %v68, %v75
    %v77 = vpack.c.bf16 %v76, %v76
    %v78 = vld [vmem:[#allocation5] sm:$0xff]
    %v79 = vld [vmem:[#allocation5 + $0x8] sm:$0xff]
    %v80 = vld [vmem:[#allocation5 + $0x10] sm:$0xff]
    %v81 = vld [vmem:[#allocation5 + $0x18] sm:$0xff]
    %v82 = vld [vmem:[%s2] sm:$0x3]
    %v84 = vlaneseq
    %v85 = vshrl.u32 %v84, 7
    %v86 = vsub.s32 0, %v85
    %v87 = vrot.slane %v82, %v86
    %v88 = vlaneseq
    %v89 = vshrl.u32 %v88, 7
    %v90 = vsub.s32 1, %v89
    %v91 = vrot.slane %v82, %v90
    %v98 = vunpack.c.l.b16 %v78
    %v99 = vunpack.c.h.b16 %v78
    %v100 = vunpack.c.l.b16 %v79
    %v101 = vunpack.c.h.b16 %v79
    %v102 = vunpack.c.l.b16 %v80
    %v103 = vunpack.c.h.b16 %v80
    %v104 = vunpack.c.l.b16 %v81
    %v105 = vunpack.c.h.b16 %v81
    %v106 = vpack.c.b16 %v100, %v98
    %v107 = vpack.c.b16 %v101, %v99
    %v108 = vpack.c.b16 %v104, %v102
    %v109 = vpack.c.b16 %v105, %v103
    %v115 = vsel %vm63, %v77, 0
    %117 = vmatprep.subr.bf16.mxu0 0
    %118 = vmatpush1.bf16.msra.mxu0 0
    %119 = vmatprep.subr.bf16.mxu0 0
    %120 = vmatpush1.bf16.msra.mxu0 0
    %121 = vmatprep.subr.bf16.mxu0 0
    %122 = vmatpush1.bf16.msra.mxu0 0
    %123 = vmatprep.subr.bf16.mxu0 0
    %124 = vmatpush1.bf16.msra.mxu0 0
    %125 = vmatprep.subr.bf16.mxu0 0
    %126 = vmatpush1.bf16.msra.mxu0 0
    %127 = vmatprep.subr.bf16.mxu0 0
    %128 = vmatpush1.bf16.msra.mxu0 0
    %129 = vmatprep.subr.bf16.mxu0 %v109
    %130 = vmatpush1.bf16.msra.mxu0 %v108
    %131 = vmatprep.subr.bf16.mxu0 %v107
    %132 = vmatpush1.bf16.msra.mxu0 %v106
    %133 = vmatprep.subr.bf16.mxu0 0
    %134 = vmatpush2.bf16.msra.mxu0 0
    %135 = vmatprep.subr.bf16.mxu0 0
    %136 = vmatpush2.bf16.msra.mxu0 0
    %137 = vmatprep.subr.bf16.mxu0 0
    %138 = vmatpush2.bf16.msra.mxu0 0
    %139 = vmatprep.subr.bf16.mxu0 0
    %140 = vmatpush2.bf16.msra.mxu0 0
    %141 = vmatprep.subr.bf16.mxu0 0
    %142 = vmatpush2.bf16.msra.mxu0 0
    %143 = vmatprep.subr.bf16.mxu0 0
    %144 = vmatpush2.bf16.msra.mxu0 0
    %145 = vmatprep.subr.bf16.mxu0 0
    %146 = vmatpush2.bf16.msra.mxu0 0
    %147 = vmatprep.subr.bf16.mxu0 0
    %148 = vmatpush2.bf16.msra.mxu0 0
    %149 = vmatprep.mubr.bf16.mxu0 0
    %150 = vmatmul.mubr.bf16.gmra.mxu0 %v115
    %v151 = vpop.f32.mrf.mxu0
    %v152 = vadd.f32 %v87, %v151
    %v153 = vpop.f32.mrf.mxu0
    %v154 = vadd.f32 %v91, %v153
    %v155 = vpop.f32.mrf.mxu0
    %v156 = vpop.f32.mrf.mxu0
    %157 = vdwg.mxu0
    %v158 = vmax.f32 %v152, 0.0
    %v159 = vmax.f32 %v154, 0.0
    %v160 = vpack.c.bf16 %v158, %v158
    %v161 = vpack.c.bf16 %v159, %v159
    %v162 = vld [vmem:[#allocation7] sm:$0xf]
    %v163 = vld [vmem:[#allocation7 + $0x4] sm:$0xf]
    %v164 = vld [vmem:[#allocation7 + $0x8] sm:$0xf]
    %v165 = vld [vmem:[#allocation7 + $0xc] sm:$0xf]
    %v166 = vld [vmem:[#allocation7 + $0x10] sm:$0xf]
    %v167 = vld [vmem:[#allocation7 + $0x14] sm:$0xf]
    %v168 = vld [vmem:[#allocation7 + $0x18] sm:$0xf]
    %v169 = vld [vmem:[#allocation7 + $0x1c] sm:$0xf]
    %v170 = vld [vmem:[#allocation7 + $0x20] sm:$0xf]
    %v171 = vld [vmem:[#allocation7 + $0x24] sm:$0xf]
    %v172 = vld [vmem:[#allocation7 + $0x28] sm:$0xf]
    %v173 = vld [vmem:[#allocation7 + $0x2c] sm:$0xf]
    %v174 = vld [vmem:[#allocation7 + $0x30] sm:$0xf]
    %v175 = vld [vmem:[#allocation7 + $0x34] sm:$0xf]
    %v176 = vld [vmem:[#allocation7 + $0x38] sm:$0xf]
    %v177 = vld [vmem:[#allocation7 + $0x3c] sm:$0xf]
    %v178 = vld [vmem:[#allocation7 + $0x40] sm:$0xf]
    %v179 = vld [vmem:[#allocation7 + $0x44] sm:$0xf]
    %v180 = vld [vmem:[#allocation7 + $0x48] sm:$0xf]
    %v181 = vld [vmem:[#allocation7 + $0x4c] sm:$0xf]
    %v182 = vld [vmem:[#allocation7 + $0x50] sm:$0xf]
    %v183 = vld [vmem:[#allocation7 + $0x54] sm:$0xf]
    %v184 = vld [vmem:[#allocation7 + $0x58] sm:$0xf]
    %v185 = vld [vmem:[#allocation7 + $0x5c] sm:$0xf]
    %v186 = vld [vmem:[#allocation7 + $0x60] sm:$0xf]
    %v187 = vld [vmem:[#allocation7 + $0x64] sm:$0xf]
    %v188 = vld [vmem:[#allocation7 + $0x68] sm:$0xf]
    %v189 = vld [vmem:[#allocation7 + $0x6c] sm:$0xf]
    %v190 = vld [vmem:[#allocation7 + $0x70] sm:$0xf]
    %v191 = vld [vmem:[#allocation7 + $0x74] sm:$0xf]
    %v192 = vld [vmem:[#allocation7 + $0x78] sm:$0xf]
    %v193 = vld [vmem:[#allocation7 + $0x7c] sm:$0xf]
    %v194 = vld [vmem:[%s4] sm:$0x1]
    %v196 = vlaneseq
    %v197 = vshrl.u32 %v196, 7
    %v198 = vsub.s32 0, %v197
    %v199 = vrot.slane %v194, %v198
    %v233 = vunpack.c.l.b16 %v162
    %v234 = vunpack.c.l.b16 %v163
    %v235 = vunpack.c.l.b16 %v164
    %v236 = vunpack.c.l.b16 %v165
    %v237 = vunpack.c.l.b16 %v166
    %v238 = vunpack.c.l.b16 %v167
    %v239 = vunpack.c.l.b16 %v168
    %v240 = vunpack.c.l.b16 %v169
    %v241 = vunpack.c.l.b16 %v170
    %v242 = vunpack.c.l.b16 %v171
    %v243 = vunpack.c.l.b16 %v172
    %v244 = vunpack.c.l.b16 %v173
    %v245 = vunpack.c.l.b16 %v174
    %v246 = vunpack.c.l.b16 %v175
    %v247 = vunpack.c.l.b16 %v176
    %v248 = vunpack.c.l.b16 %v177
    %v249 = vunpack.c.l.b16 %v178
    %v250 = vunpack.c.l.b16 %v179
    %v251 = vunpack.c.l.b16 %v180
    %v252 = vunpack.c.l.b16 %v181
    %v253 = vunpack.c.l.b16 %v182
    %v254 = vunpack.c.l.b16 %v183
    %v255 = vunpack.c.l.b16 %v184
    %v256 = vunpack.c.l.b16 %v185
    %v257 = vunpack.c.l.b16 %v186
    %v258 = vunpack.c.l.b16 %v187
    %v259 = vunpack.c.l.b16 %v188
    %v260 = vunpack.c.l.b16 %v189
    %v261 = vunpack.c.l.b16 %v190
    %v262 = vunpack.c.l.b16 %v191
    %v263 = vunpack.c.l.b16 %v192
    %v264 = vunpack.c.l.b16 %v193
    %v265 = vpack.c.b16 %v234, %v233
    %v266 = vpack.c.b16 %v236, %v235
    %v267 = vpack.c.b16 %v238, %v237
    %v268 = vpack.c.b16 %v240, %v239
    %v269 = vpack.c.b16 %v242, %v241
    %v270 = vpack.c.b16 %v244, %v243
    %v271 = vpack.c.b16 %v246, %v245
    %v272 = vpack.c.b16 %v248, %v247
    %v273 = vpack.c.b16 %v250, %v249
    %v274 = vpack.c.b16 %v252, %v251
    %v275 = vpack.c.b16 %v254, %v253
    %v276 = vpack.c.b16 %v256, %v255
    %v277 = vpack.c.b16 %v258, %v257
    %v278 = vpack.c.b16 %v260, %v259
    %v279 = vpack.c.b16 %v262, %v261
    %v280 = vpack.c.b16 %v264, %v263
    %297 = vmatprep.subr.bf16.mxu0 0
    %298 = vmatpush1.bf16.msra.mxu0 %v272
    %299 = vmatprep.subr.bf16.mxu0 0
    %300 = vmatpush1.bf16.msra.mxu0 %v271
    %301 = vmatprep.subr.bf16.mxu0 0
    %302 = vmatpush1.bf16.msra.mxu0 %v270
    %303 = vmatprep.subr.bf16.mxu0 0
    %304 = vmatpush1.bf16.msra.mxu0 %v269
    %305 = vmatprep.subr.bf16.mxu0 0
    %306 = vmatpush1.bf16.msra.mxu0 %v268
    %307 = vmatprep.subr.bf16.mxu0 0
    %308 = vmatpush1.bf16.msra.mxu0 %v267
    %309 = vmatprep.subr.bf16.mxu0 0
    %310 = vmatpush1.bf16.msra.mxu0 %v266
    %311 = vmatprep.subr.bf16.mxu0 0
    %312 = vmatpush1.bf16.msra.mxu0 %v265
    %313 = vmatprep.subr.bf16.mxu0 0
    %314 = vmatpush2.bf16.msra.mxu0 %v280
    %315 = vmatprep.subr.bf16.mxu0 0
    %316 = vmatpush2.bf16.msra.mxu0 %v279
    %317 = vmatprep.subr.bf16.mxu0 0
    %318 = vmatpush2.bf16.msra.mxu0 %v278
    %319 = vmatprep.subr.bf16.mxu0 0
    %320 = vmatpush2.bf16.msra.mxu0 %v277
    %321 = vmatprep.subr.bf16.mxu0 0
    %322 = vmatpush2.bf16.msra.mxu0 %v276
    %323 = vmatprep.subr.bf16.mxu0 0
    %324 = vmatpush2.bf16.msra.mxu0 %v275
    %325 = vmatprep.subr.bf16.mxu0 0
    %326 = vmatpush2.bf16.msra.mxu0 %v274
    %327 = vmatprep.subr.bf16.mxu0 0
    %328 = vmatpush2.bf16.msra.mxu0 %v273
    %329 = vmatprep.mubr.bf16.mxu0 %v161
    %330 = vmatmul.mubr.bf16.gmra.mxu0 %v160
    %v331 = vpop.f32.mrf.mxu0
    %v332 = vadd.f32 %v199, %v331
    %v333 = vpop.f32.mrf.mxu0
    %v334 = vpop.f32.mrf.mxu0
    %v335 = vpop.f32.mrf.mxu0
    %336 = vdwg.mxu0
    %v337 = vpack.c.bf16 %v332, %v332
    %338 = vst [vmem:[#allocation8] sm:$0xf] %v337
    // Predicated region
    $region34: #{tpu_custom_call.1} parent=1 // pred_check
      _
    $region35: #{tpu_custom_call.1} parent=1 // pred_check_branch
      %340 = sbr.rel (0) target = $region37
    $region36: #{tpu_custom_call.1} parent=1 // pred_region
      %s342 = ssub.s32 64, 64
      %343 = vsyncadd [#allocation4], %s342
      %s345 = sshll.u32 [#allocation8], 4
      %s346 = int_to_ptr.vmem [resolvable:$true] %s345
      %348 = dma.vmem_to_hbm [thread:$0]  %s346, 64, %s5, [#allocation4]
    $region37: #{tpu_custom_call.1} parent=1 // pred_fallthru
      _
    // Predicated region
    $region38: #{tpu_custom_call.1} parent=1 // pred_check
      _
    $region39: #{tpu_custom_call.1} parent=1 // pred_check_branch
      %350 = sbr.rel (0) target = $region41
    $region40: #{tpu_custom_call.1} parent=1 // pred_region
      %351 = dma.done [#allocation4], 64
    $region41: #{tpu_custom_call.1} parent=1 // pred_fallthru
      _
    %352 = vsyncpa [#allocation3], 1
    %353 = vsyncpa [#allocation6], 1
    %354 = vsyncpa [#allocation4], 1

</llo_original>
